<compile_context>
chip_gen: v7x
topology: tpu7x:2x2x1
jax: 0.10.0
libtpu: 0.0.40
codegen_flags: <defaults>
</compile_context>

<pallas_src>
import jax
import jax.numpy as jnp
from jax.experimental import pallas as pl
from jax.experimental.pallas import tpu as pltpu


# ----------------------------------------------------------------------------
# Pallas kernel (factory closes over static H, W, Cin, Cout, Cint, NB)
# ----------------------------------------------------------------------------
def _make_repblock_kernel(H, W, Cin, Cout, Cint, NB):
    HW = H * W

    def kernel(x_ref, w_ref, p_ref, col_ref, o_ref, patches_ref):
        # x_ref      : (NB, Cin, XL)      bf16  channel-first, 2 zero rows padded
        #                                       top & bottom, flattened, lane-padded
        # w_ref      : (Cout, 9*Cin)      bf16  fused 3x3 kernel, col=(dy*3+dx)*Cin+ci
        # p_ref      : (Cout, 2+3*Cint)   f32   packed {bias, wd, wu, bu, bd}
        # col_ref    : (1, HW)            i32   column-in-row index of each lane
        # o_ref      : (NB, Cout, HW)     bf16  lane-dense output slab
        # patches_ref: (9*Cin, NB*HW)     bf16  VMEM scratch (transposed im2col)

        # Border masks as booleans -> vselects (no bf16 multiplies; v5e-friendly).
        colb = jnp.broadcast_to(col_ref[...], (Cin, HW))        # i32 (Cin, HW)
        not_left = colb != 0
        not_right = colb != (W - 1)

        # Transposed im2col for all NB images of this step, batched along lanes.
        # Each 3x3 tap of each image is a contiguous lane-offset slice of its
        # flattened padded slab (row shift dy -> +dy*W lanes, col shift dx ->
        # +(dx-1) lanes); a boolean lane select fixes the row wrap-around.
        # TODO(synk): at production HW_tile sizes, load one slab per dy and
        # derive the dx=0/2 taps with pltpu.roll to cut vld/XLU traffic ~3x.
        for n in range(NB):
            x2d = x_ref[n]                                       # (Cin, XL) bf16
            for t in range(9):
                dy, dx = t // 3, t % 3
                start = (dy + 1) * W + (dx - 1)                  # >= W-1 >= 0
                slab = x2d[:, start:start + HW]                  # (Cin, HW)
                if dx == 0:
                    slab = jnp.where(not_left, slab, 0.0)
                elif dx == 2:
                    slab = jnp.where(not_right, slab, 0.0)
                patches_ref[t * Cin:(t + 1) * Cin, n * HW:(n + 1) * HW] = slab

        # Fused 3x3 conv for the whole step as ONE wide-K MXU matmul with f32
        # accumulation: (Cout, 9*Cin) @ (9*Cin, NB*HW) -> (Cout, NB*HW).
        s = jnp.dot(w_ref[...], patches_ref[...],
                    preferred_element_type=jnp.float32)

        # Unpack the tiny fused parameters (single DMA'd slab, static slices).
        bias = p_ref[:, 0:1]                                     # (Cout, 1)
        wd = p_ref[:, 1:1 + Cint]                                # (Cout, Cint)
        wu = p_ref[:, 1 + Cint:1 + 2 * Cint]                     # (Cout, Cint)
        bu = p_ref[:, 1 + 2 * Cint:2 + 2 * Cint]                 # (Cout, 1)
        bd = p_ref[0:1, 2 + 2 * Cint:2 + 3 * Cint]               # (1, Cint)

        s = s + bias                                             # lane broadcast

        # SE + final ReLU per image (global-average pool is per-image).
        # Stays on VPU/XLU/EUP — no tiny MXU matmuls. Lane-dense bf16 stores.
        for n in range(NB):
            sn = s[:, n * HW:(n + 1) * HW]                       # (Cout, HW) f32
            pooled = jnp.mean(sn, axis=1, keepdims=True)         # (Cout, 1)
            hid = jnp.sum(wd * pooled, axis=0, keepdims=True) + bd
            hid = jnp.maximum(hid, 0.0)                          # (1, Cint)
            scale = jax.nn.sigmoid(
                jnp.sum(wu * hid, axis=1, keepdims=True) + bu)   # (Cout, 1)
            o_ref[n] = jnp.maximum(sn * scale, 0.0).astype(o_ref.dtype)

    return kernel


# ----------------------------------------------------------------------------
# Wrapper
# ----------------------------------------------------------------------------
def repblock_pallas(x_nchw, w_flat, bias, w_down, b_down, w_up, b_up,
                    num_steps=None):
    """x_nchw: (N, Cin, H, W). Returns (N, Cout, H, W) bfloat16."""
    N, Cin, H, W = x_nchw.shape
    Cout = w_flat.shape[0]
    Cint = w_down.shape[1]
    HW = H * W
    Hp = H + 4

    # Grid policy: at most 2 "parallel" grid steps so both v7x TensorCores get
    # work (no cost on single-TC v5e/v6e); each step batches NB images into the
    # lane axis so the per-step matmul/output slabs stay wide and the fixed
    # per-step overhead is amortized at larger N.
    if num_steps is None:
        num_steps = 2 if (N >= 2 and N % 2 == 0) else 1
    assert N % num_steps == 0
    NB = N // num_steps

    # Lane-pad the flattened padded input so input blocks are dense lane tiles.
    XL = ((Hp * W + 127) // 128) * 128

    # bf16 MXU operands (f32 accumulation in-kernel); SE path stays f32.
    xb = x_nchw.astype(jnp.bfloat16)
    x_pad = jnp.pad(xb, ((0, 0), (0, 0), (2, 2), (0, 0))).reshape(N, Cin, Hp * W)
    x_pad = jnp.pad(x_pad, ((0, 0), (0, 0), (0, XL - Hp * W)))

    wb = w_flat.astype(jnp.bfloat16)                             # (Cout, 9*Cin)

    # Pack all tiny f32 parameters into one slab: one DMA instead of five.
    P = 2 + 3 * Cint
    params = jnp.zeros((Cout, P), jnp.float32)
    params = params.at[:, 0].set(bias.astype(jnp.float32))
    params = params.at[:, 1:1 + Cint].set(w_down.astype(jnp.float32))
    params = params.at[:, 1 + Cint:1 + 2 * Cint].set(w_up.astype(jnp.float32))
    params = params.at[:, 1 + 2 * Cint].set(b_up.astype(jnp.float32))
    params = params.at[0, 2 + 2 * Cint:2 + 3 * Cint].set(b_down.astype(jnp.float32))

    # Column-in-row index of each output lane (drives in-kernel border selects).
    col_idx = (jnp.arange(HW, dtype=jnp.int32) % W).reshape(1, HW)

    kernel = _make_repblock_kernel(H, W, Cin, Cout, Cint, NB)

    # TODO(synk): for production RepVGG shapes (large H*W / Cin), add a spatial
    # grid axis with a 2-row halo; budget 9*Cin*HW_tile*2B patches scratch plus
    # double-buffered in/out blocks against VMEM (<= ~48 MiB on v7x's 64 MiB,
    # ~100 MiB on v5e/v6e) and raise vmem_limit_bytes explicitly.
    out = pl.pallas_call(
        kernel,
        out_shape=jax.ShapeDtypeStruct((N, Cout, HW), jnp.bfloat16),
        grid_spec=pltpu.PrefetchScalarGridSpec(
            num_scalar_prefetch=0,
            grid=(num_steps,),
            in_specs=[
                pl.BlockSpec((NB, Cin, XL), lambda b: (b, 0, 0)),
                pl.BlockSpec((Cout, 9 * Cin), lambda b: (0, 0)),
                pl.BlockSpec((Cout, P), lambda b: (0, 0)),
                pl.BlockSpec((1, HW), lambda b: (0, 0)),
            ],
            out_specs=pl.BlockSpec((NB, Cout, HW), lambda b: (b, 0, 0)),
            scratch_shapes=[pltpu.VMEM((9 * Cin, NB * HW), jnp.bfloat16)],
        ),
        compiler_params=pltpu.CompilerParams(
            dimension_semantics=("parallel",)),
    )(x_pad, wb, params, col_idx)

    return out.reshape(N, Cout, H, W)


# ----------------------------------------------------------------------------
# Parameter setup (deterministic) + branch/BN fusion (pure-JAX glue).
# ----------------------------------------------------------------------------
def fuse_conv_bn(kernel_oihw, gamma, beta, rm, rv, eps=1e-5):
    std = jnp.sqrt(rv + eps)
    t = gamma / std
    return kernel_oihw * t[:, None, None, None], beta - rm * gamma / std


def make_params(key, cin, cout):
    assert cin == cout, "identity branch requires in_channels == out_channels"
    cint = cout // 8
    ks = jax.random.split(key, 16)
    p = {}
    # rbr_dense: 3x3 conv (no bias) + BN
    p["k3"] = 0.1 * jax.random.normal(ks[0], (cout, cin, 3, 3), jnp.float32)
    p["g3"] = 1.0 + 0.1 * jax.random.normal(ks[1], (cout,), jnp.float32)
    p["b3"] = 0.1 * jax.random.normal(ks[2], (cout,), jnp.float32)
    p["rm3"] = 0.1 * jax.random.normal(ks[3], (cout,), jnp.float32)
    p["rv3"] = jax.random.uniform(ks[4], (cout,), jnp.float32, 0.5, 1.5)
    # rbr_1x1: 1x1 conv (no bias) + BN
    p["k1"] = 0.1 * jax.random.normal(ks[5], (cout, cin, 1, 1), jnp.float32)
    p["g1"] = 1.0 + 0.1 * jax.random.normal(ks[6], (cout,), jnp.float32)
    p["b1"] = 0.1 * jax.random.normal(ks[7], (cout,), jnp.float32)
    p["rm1"] = 0.1 * jax.random.normal(ks[8], (cout,), jnp.float32)
    p["rv1"] = jax.random.uniform(ks[9], (cout,), jnp.float32, 0.5, 1.5)
    # rbr_identity: BN
    p["gid"] = 1.0 + 0.1 * jax.random.normal(ks[10], (cin,), jnp.float32)
    p["bid"] = 0.1 * jax.random.normal(ks[11], (cin,), jnp.float32)
    p["rmid"] = 0.1 * jax.random.normal(ks[12], (cin,), jnp.float32)
    p["rvid"] = jax.random.uniform(ks[13], (cin,), jnp.float32, 0.5, 1.5)
    # SE block (1x1 convs with bias)
    p["sed_w"] = 0.1 * jax.random.normal(ks[14], (cint, cout, 1, 1), jnp.float32)
    p["sed_b"] = jnp.zeros((cint,), jnp.float32)
    p["seu_w"] = 0.1 * jax.random.normal(ks[15], (cout, cint, 1, 1), jnp.float32)
    p["seu_b"] = jnp.zeros((cout,), jnp.float32)
    return p


def fuse_repblock_params(p, cin, cout):
    """Equivalent of RepBlock.get_equivalent_kernel_bias (eval-mode BN),
    reshaped once to the matmul layouts used inside the kernel."""
    k3, b3 = fuse_conv_bn(p["k3"], p["g3"], p["b3"], p["rm3"], p["rv3"])
    k1, b1 = fuse_conv_bn(p["k1"], p["g1"], p["b1"], p["rm1"], p["rv1"])
    k1 = jnp.pad(k1, ((0, 0), (0, 0), (1, 1), (1, 1)))   # 1x1 -> center of 3x3
    kid_raw = jnp.zeros((cin, cin, 3, 3), jnp.float32).at[
        jnp.arange(cin), jnp.arange(cin), 1, 1].set(1.0)
    kid, bid = fuse_conv_bn(kid_raw, p["gid"], p["bid"], p["rmid"], p["rvid"])
    kernel = k3 + k1 + kid                                # OIHW
    bias = b3 + b1 + bid
    # (O, I, 3, 3) -> (O, 3, 3, I) -> (O, 9*I); column = (dy*3+dx)*Cin + ci.
    w_flat = jnp.transpose(kernel, (0, 2, 3, 1)).reshape(cout, 9 * cin)
    # SE 1x1 convs as (Cout, Cint) matrices matching the in-kernel reductions.
    w_down = jnp.transpose(p["sed_w"][:, :, 0, 0], (1, 0))   # (Cout, Cint)
    w_up = p["seu_w"][:, :, 0, 0]                            # (Cout, Cint)
    return w_flat, bias, w_down, p["sed_b"], w_up, p["seu_b"]


# ----------------------------------------------------------------------------
# References for validation.
# ----------------------------------------------------------------------------
def reference_repblock(x_nchw, p):
    """Un-fused f32 branches (spec-level reference)."""
    def conv(x, w, pad):
        return jax.lax.conv_general_dilated(
            x, w, (1, 1), [(pad, pad), (pad, pad)],
            dimension_numbers=("NCHW", "OIHW", "NCHW"))

    def bn(x, g, b, rm, rv, eps=1e-5):
        inv = g / jnp.sqrt(rv + eps)
        return x * inv[None, :, None, None] + (b - rm * inv)[None, :, None, None]

    dense = bn(conv(x_nchw, p["k3"], 1), p["g3"], p["b3"], p["rm3"], p["rv3"])
    one = bn(conv(x_nchw, p["k1"], 0), p["g1"], p["b1"], p["rm1"], p["rv1"])
    ident = bn(x_nchw, p["gid"], p["bid"], p["rmid"], p["rvid"])
    s = dense + one + ident
    pooled = jnp.mean(s, axis=(2, 3), keepdims=True)                 # (N,C,1,1)
    h = jax.nn.relu(conv(pooled, p["sed_w"], 0) + p["sed_b"][None, :, None, None])
    scale = jax.nn.sigmoid(conv(h, p["seu_w"], 0) + p["seu_b"][None, :, None, None])
    return jax.nn.relu(s * scale)


def reference_fused_bf16(x_nchw, w_flat, bias, w_down, b_down, w_up, b_up):
    """Pure-JAX model of the kernel's arithmetic (bf16 operands, f32 accum)."""
    N, Cin, H, W = x_nchw.shape
    Cout = w_flat.shape[0]
    xb = x_nchw.astype(jnp.bfloat16)
    k = w_flat.reshape(Cout, 3, 3, Cin).transpose(0, 3, 1, 2).astype(jnp.bfloat16)
    s = jax.lax.conv_general_dilated(
        xb, k, (1, 1), [(1, 1), (1, 1)],
        dimension_numbers=("NCHW", "OIHW", "NCHW"),
        preferred_element_type=jnp.float32)
    s = s + bias[None, :, None, None]
    pooled = jnp.mean(s, axis=(2, 3), keepdims=True)                  # (N,C,1,1)
    hid = jax.nn.relu(jnp.einsum("ci,ncxy->nixy", w_down, pooled)
                      + b_down[None, :, None, None])
    scale = jax.nn.sigmoid(jnp.einsum("ci,nixy->ncxy", w_up, hid)
                           + b_up[None, :, None, None])
    return jax.nn.relu(s * scale)


if __name__ == "__main__":
    N, C, H, W = 2, 16, 16, 16   # in_channels == out_channels == 16, SE hidden = 2
    key = jax.random.PRNGKey(0)
    kx, kp = jax.random.split(key)
    x_nchw = jax.random.normal(kx, (N, C, H, W), jnp.float32)

    params = make_params(kp, C, C)
    fused = fuse_repblock_params(params, C, C)

    out = repblock_pallas(x_nchw, *fused).astype(jnp.float32)
    jax.block_until_ready(out)

    # Tight check: identical fused math (bf16 operands, f32 accumulation) in JAX.
    ref_fused = reference_fused_bf16(x_nchw, *fused)
    err_fused = float(jnp.max(jnp.abs(out - ref_fused)))
    assert err_fused < 6e-2, f"mismatch vs fused bf16 reference: {err_fused}"

    # Spec-level check: un-fused f32 branches on bf16-quantized activations.
    x_q = x_nchw.astype(jnp.bfloat16).astype(jnp.float32)
    ref = reference_repblock(x_q, params)
    err = float(jnp.max(jnp.abs(out - ref)))
    assert err < 1.5e-1, f"mismatch vs unfused reference: {err}"

    print("KERNEL_OK")
</pallas_src>

<mosaic_0001>
module attributes {stable_mosaic.version = 11 : i64} {
  func.func @kernel(%arg0: i32, %arg1: memref<1x16x384xbf16, #tpu.memory_space<vmem>>, %arg2: memref<16x144xbf16, #tpu.memory_space<vmem>>, %arg3: memref<16x8xf32, #tpu.memory_space<vmem>>, %arg4: memref<1x256xi32, #tpu.memory_space<vmem>>, %arg5: memref<1x16x256xbf16, #tpu.memory_space<vmem>>, %arg6: memref<144x256xbf16, #tpu.memory_space<vmem>>) attributes {dimension_semantics = [#tpu.dimension_semantics<parallel>], iteration_bounds = array<i64: 2>, scalar_prefetch = 0 : i64, scratch_operands = 1 : i64, tpu.core_type = #tpu.core_type<tc>, window_params = [{transform_indices = @transform_0, window_bounds = array<i64: 1, 16, 384>}, {pipeline_mode = #tpu.pipeline_mode<synchronous>, transform_indices = @transform_1, window_bounds = array<i64: 16, 144>}, {pipeline_mode = #tpu.pipeline_mode<synchronous>, transform_indices = @transform_2, window_bounds = array<i64: 16, 8>}, {pipeline_mode = #tpu.pipeline_mode<synchronous>, transform_indices = @transform_3, window_bounds = array<i64: 1, 256>}, {transform_indices = @transform_4, window_bounds = array<i64: 1, 16, 256>}]} {
    %c0 = arith.constant 0 : index
    %c0_0 = arith.constant 0 : index
    %0 = vector.load %arg4[%c0, %c0_0] : memref<1x256xi32, #tpu.memory_space<vmem>>, vector<1x256xi32>
    %1 = vector.shape_cast %0 : vector<1x256xi32> to vector<1x256xi32>
    %2 = vector.broadcast %1 : vector<1x256xi32> to vector<16x256xi32>
    %c0_i32 = arith.constant 0 : i32
    %3 = vector.broadcast %c0_i32 : i32 to vector<16x256xi32>
    %4 = arith.cmpi ne, %2, %3 : vector<16x256xi32>
    %c15_i32 = arith.constant 15 : i32
    %5 = vector.broadcast %c15_i32 : i32 to vector<16x256xi32>
    %6 = arith.cmpi ne, %2, %5 : vector<16x256xi32>
    %c0_1 = arith.constant 0 : index
    %c0_2 = arith.constant 0 : index
    %c0_3 = arith.constant 0 : index
    %7 = vector.load %arg1[%c0_1, %c0_2, %c0_3] : memref<1x16x384xbf16, #tpu.memory_space<vmem>>, vector<1x16x384xbf16>
    %8 = vector.shape_cast %7 : vector<1x16x384xbf16> to vector<16x384xbf16>
    %9 = vector.extract_strided_slice %8 {offsets = [0, 15], sizes = [16, 256], strides = [1, 1]} : vector<16x384xbf16> to vector<16x256xbf16>
    %cst = arith.constant 0.000000e+00 : f32
    %10 = arith.truncf %cst : f32 to bf16
    %11 = vector.broadcast %10 : bf16 to vector<16x256xbf16>
    %12 = arith.select %4, %9, %11 : vector<16x256xi1>, vector<16x256xbf16>
    %c0_4 = arith.constant 0 : index
    %c0_5 = arith.constant 0 : index
    %13 = vector.load %arg6[%c0_4, %c0_5] : memref<144x256xbf16, #tpu.memory_space<vmem>>, vector<16x256xbf16>
    tpu.vector_store %arg6[%c0_4, %c0_5], %12 {strides = array<i32>} : memref<144x256xbf16, #tpu.memory_space<vmem>>, vector<16x256xbf16>,
    %14 = vector.extract_strided_slice %8 {offsets = [0, 16], sizes = [16, 256], strides = [1, 1]} : vector<16x384xbf16> to vector<16x256xbf16>
    %c16 = arith.constant 16 : index
    %c0_6 = arith.constant 0 : index
    %15 = vector.load %arg6[%c16, %c0_6] : memref<144x256xbf16, #tpu.memory_space<vmem>>, vector<16x256xbf16>
    tpu.vector_store %arg6[%c16, %c0_6], %14 {strides = array<i32>} : memref<144x256xbf16, #tpu.memory_space<vmem>>, vector<16x256xbf16>,
    %16 = vector.extract_strided_slice %8 {offsets = [0, 17], sizes = [16, 256], strides = [1, 1]} : vector<16x384xbf16> to vector<16x256xbf16>
    %cst_7 = arith.constant 0.000000e+00 : f32
    %17 = arith.truncf %cst_7 : f32 to bf16
    %18 = vector.broadcast %17 : bf16 to vector<16x256xbf16>
    %19 = arith.select %6, %16, %18 : vector<16x256xi1>, vector<16x256xbf16>
    %c32 = arith.constant 32 : index
    %c0_8 = arith.constant 0 : index
    %20 = vector.load %arg6[%c32, %c0_8] : memref<144x256xbf16, #tpu.memory_space<vmem>>, vector<16x256xbf16>
    tpu.vector_store %arg6[%c32, %c0_8], %19 {strides = array<i32>} : memref<144x256xbf16, #tpu.memory_space<vmem>>, vector<16x256xbf16>,
    %21 = vector.extract_strided_slice %8 {offsets = [0, 31], sizes = [16, 256], strides = [1, 1]} : vector<16x384xbf16> to vector<16x256xbf16>
    %cst_9 = arith.constant 0.000000e+00 : f32
    %22 = arith.truncf %cst_9 : f32 to bf16
    %23 = vector.broadcast %22 : bf16 to vector<16x256xbf16>
    %24 = arith.select %4, %21, %23 : vector<16x256xi1>, vector<16x256xbf16>
    %c48 = arith.constant 48 : index
    %c0_10 = arith.constant 0 : index
    %25 = vector.load %arg6[%c48, %c0_10] : memref<144x256xbf16, #tpu.memory_space<vmem>>, vector<16x256xbf16>
    tpu.vector_store %arg6[%c48, %c0_10], %24 {strides = array<i32>} : memref<144x256xbf16, #tpu.memory_space<vmem>>, vector<16x256xbf16>,
    %26 = vector.extract_strided_slice %8 {offsets = [0, 32], sizes = [16, 256], strides = [1, 1]} : vector<16x384xbf16> to vector<16x256xbf16>
    %c64 = arith.constant 64 : index
    %c0_11 = arith.constant 0 : index
    %27 = vector.load %arg6[%c64, %c0_11] : memref<144x256xbf16, #tpu.memory_space<vmem>>, vector<16x256xbf16>
    tpu.vector_store %arg6[%c64, %c0_11], %26 {strides = array<i32>} : memref<144x256xbf16, #tpu.memory_space<vmem>>, vector<16x256xbf16>,
    %28 = vector.extract_strided_slice %8 {offsets = [0, 33], sizes = [16, 256], strides = [1, 1]} : vector<16x384xbf16> to vector<16x256xbf16>
    %cst_12 = arith.constant 0.000000e+00 : f32
    %29 = arith.truncf %cst_12 : f32 to bf16
    %30 = vector.broadcast %29 : bf16 to vector<16x256xbf16>
    %31 = arith.select %6, %28, %30 : vector<16x256xi1>, vector<16x256xbf16>
    %c80 = arith.constant 80 : index
    %c0_13 = arith.constant 0 : index
    %32 = vector.load %arg6[%c80, %c0_13] : memref<144x256xbf16, #tpu.memory_space<vmem>>, vector<16x256xbf16>
    tpu.vector_store %arg6[%c80, %c0_13], %31 {strides = array<i32>} : memref<144x256xbf16, #tpu.memory_space<vmem>>, vector<16x256xbf16>,
    %33 = vector.extract_strided_slice %8 {offsets = [0, 47], sizes = [16, 256], strides = [1, 1]} : vector<16x384xbf16> to vector<16x256xbf16>
    %cst_14 = arith.constant 0.000000e+00 : f32
    %34 = arith.truncf %cst_14 : f32 to bf16
    %35 = vector.broadcast %34 : bf16 to vector<16x256xbf16>
    %36 = arith.select %4, %33, %35 : vector<16x256xi1>, vector<16x256xbf16>
    %c96 = arith.constant 96 : index
    %c0_15 = arith.constant 0 : index
    %37 = vector.load %arg6[%c96, %c0_15] : memref<144x256xbf16, #tpu.memory_space<vmem>>, vector<16x256xbf16>
    tpu.vector_store %arg6[%c96, %c0_15], %36 {strides = array<i32>} : memref<144x256xbf16, #tpu.memory_space<vmem>>, vector<16x256xbf16>,
    %38 = vector.extract_strided_slice %8 {offsets = [0, 48], sizes = [16, 256], strides = [1, 1]} : vector<16x384xbf16> to vector<16x256xbf16>
    %c112 = arith.constant 112 : index
    %c0_16 = arith.constant 0 : index
    %39 = vector.load %arg6[%c112, %c0_16] : memref<144x256xbf16, #tpu.memory_space<vmem>>, vector<16x256xbf16>
    tpu.vector_store %arg6[%c112, %c0_16], %38 {strides = array<i32>} : memref<144x256xbf16, #tpu.memory_space<vmem>>, vector<16x256xbf16>,
    %40 = vector.extract_strided_slice %8 {offsets = [0, 49], sizes = [16, 256], strides = [1, 1]} : vector<16x384xbf16> to vector<16x256xbf16>
    %cst_17 = arith.constant 0.000000e+00 : f32
    %41 = arith.truncf %cst_17 : f32 to bf16
    %42 = vector.broadcast %41 : bf16 to vector<16x256xbf16>
    %43 = arith.select %6, %40, %42 : vector<16x256xi1>, vector<16x256xbf16>
    %c128 = arith.constant 128 : index
    %c0_18 = arith.constant 0 : index
    %44 = vector.load %arg6[%c128, %c0_18] : memref<144x256xbf16, #tpu.memory_space<vmem>>, vector<16x256xbf16>
    tpu.vector_store %arg6[%c128, %c0_18], %43 {strides = array<i32>} : memref<144x256xbf16, #tpu.memory_space<vmem>>, vector<16x256xbf16>,
    %c0_19 = arith.constant 0 : index
    %c0_20 = arith.constant 0 : index
    %45 = vector.load %arg2[%c0_19, %c0_20] : memref<16x144xbf16, #tpu.memory_space<vmem>>, vector<16x144xbf16>
    %c0_21 = arith.constant 0 : index
    %c0_22 = arith.constant 0 : index
    %46 = vector.load %arg6[%c0_21, %c0_22] : memref<144x256xbf16, #tpu.memory_space<vmem>>, vector<144x256xbf16>
    %cst_23 = arith.constant dense<0.000000e+00> : vector<16x256xf32>
    %47 = tpu.matmul %45, %46, %cst_23 {dimension_numbers = #tpu.dot_dimension_numbers<[1], [0], [0], [1], [0, 0, 1, 1], [], []>} : vector<16x144xbf16>, vector<144x256xbf16>, vector<16x256xf32> -> vector<16x256xf32>
    %c0_24 = arith.constant 0 : index
    %c0_25 = arith.constant 0 : index
    %48 = vector.load %arg3[%c0_24, %c0_25] : memref<16x8xf32, #tpu.memory_space<vmem>>, vector<16x1xf32>
    %c0_26 = arith.constant 0 : index
    %c1 = arith.constant 1 : index
    %49 = vector.load %arg3[%c0_26, %c1] : memref<16x8xf32, #tpu.memory_space<vmem>>, vector<16x2xf32>
    %c0_27 = arith.constant 0 : index
    %c3 = arith.constant 3 : index
    %50 = vector.load %arg3[%c0_27, %c3] : memref<16x8xf32, #tpu.memory_space<vmem>>, vector<16x2xf32>
    %c0_28 = arith.constant 0 : index
    %c5 = arith.constant 5 : index
    %51 = vector.load %arg3[%c0_28, %c5] : memref<16x8xf32, #tpu.memory_space<vmem>>, vector<16x1xf32>
    %c0_29 = arith.constant 0 : index
    %c6 = arith.constant 6 : index
    %52 = vector.load %arg3[%c0_29, %c6] : memref<16x8xf32, #tpu.memory_space<vmem>>, vector<1x2xf32>
    %53 = vector.broadcast %48 : vector<16x1xf32> to vector<16x256xf32>
    %54 = arith.addf %47, %53 : vector<16x256xf32>
    %cst_30 = arith.constant dense<0.000000e+00> : vector<16xf32>
    %55 = vector.multi_reduction <add>, %54, %cst_30 [1] : vector<16x256xf32> to vector<16xf32>
    %56 = vector.shape_cast %55 : vector<16xf32> to vector<16x1xf32>
    %cst_31 = arith.constant 2.560000e+02 : f32
    %57 = vector.broadcast %cst_31 : f32 to vector<16x1xf32>
    %58 = arith.divf %56, %57 : vector<16x1xf32>
    %59 = vector.broadcast %58 : vector<16x1xf32> to vector<16x2xf32>
    %60 = arith.mulf %49, %59 : vector<16x2xf32>
    %cst_32 = arith.constant dense<0.000000e+00> : vector<2xf32>
    %61 = vector.multi_reduction <add>, %60, %cst_32 [0] : vector<16x2xf32> to vector<2xf32>
    %62 = vector.shape_cast %61 : vector<2xf32> to vector<1x2xf32>
    %63 = arith.addf %62, %52 : vector<1x2xf32>
    %cst_33 = arith.constant 0.000000e+00 : f32
    %64 = vector.broadcast %cst_33 : f32 to vector<1x2xf32>
    %65 = arith.maximumf %63, %64 : vector<1x2xf32>
    %66 = vector.broadcast %65 : vector<1x2xf32> to vector<16x2xf32>
    %67 = arith.mulf %50, %66 : vector<16x2xf32>
    %cst_34 = arith.constant dense<0.000000e+00> : vector<16xf32>
    %68 = vector.multi_reduction <add>, %67, %cst_34 [1] : vector<16x2xf32> to vector<16xf32>
    %69 = vector.shape_cast %68 : vector<16xf32> to vector<16x1xf32>
    %70 = arith.addf %69, %51 : vector<16x1xf32>
    %71 = arith.negf %70 : vector<16x1xf32>
    %72 = math.exp %71 : vector<16x1xf32>
    %cst_35 = arith.constant 1.000000e+00 : f32
    %73 = vector.broadcast %cst_35 : f32 to vector<16x1xf32>
    %74 = arith.addf %73, %72 : vector<16x1xf32>
    %75 = arith.divf %73, %74 : vector<16x1xf32>
    %76 = vector.broadcast %75 : vector<16x1xf32> to vector<16x256xf32>
    %77 = arith.mulf %54, %76 : vector<16x256xf32>
    %cst_36 = arith.constant 0.000000e+00 : f32
    %78 = vector.broadcast %cst_36 : f32 to vector<16x256xf32>
    %79 = arith.maximumf %77, %78 : vector<16x256xf32>
    %80 = arith.truncf %79 : vector<16x256xf32> to vector<16x256xbf16>
    %c0_37 = arith.constant 0 : index
    %c0_38 = arith.constant 0 : index
    %c0_39 = arith.constant 0 : index
    %81 = vector.load %arg5[%c0_37, %c0_38, %c0_39] : memref<1x16x256xbf16, #tpu.memory_space<vmem>>, vector<1x16x256xbf16>
    %82 = vector.shape_cast %81 : vector<1x16x256xbf16> to vector<16x256xbf16>
    %83 = vector.shape_cast %80 : vector<16x256xbf16> to vector<1x16x256xbf16>
    tpu.vector_store %arg5[%c0_37, %c0_38, %c0_39], %83 {strides = array<i32>} : memref<1x16x256xbf16, #tpu.memory_space<vmem>>, vector<1x16x256xbf16>,
    return
  }
  func.func @transform_0(%arg0: i32) -> (i32, i32, i32) {
    %c0_i32 = arith.constant 0 : i32
    %c0_i32_0 = arith.constant 0 : i32
    %c0_i32_1 = arith.constant 0 : i32
    return %arg0, %c0_i32, %c0_i32_0 : i32, i32, i32
  }
  func.func @transform_1(%arg0: i32) -> (i32, i32) {
    %c0_i32 = arith.constant 0 : i32
    %c0_i32_0 = arith.constant 0 : i32
    %c0_i32_1 = arith.constant 0 : i32
    return %c0_i32, %c0_i32_0 : i32, i32
  }
  func.func @transform_2(%arg0: i32) -> (i32, i32) {
    %c0_i32 = arith.constant 0 : i32
    %c0_i32_0 = arith.constant 0 : i32
    %c0_i32_1 = arith.constant 0 : i32
    return %c0_i32, %c0_i32_0 : i32, i32
  }
  func.func @transform_3(%arg0: i32) -> (i32, i32) {
    %c0_i32 = arith.constant 0 : i32
    %c0_i32_0 = arith.constant 0 : i32
    %c0_i32_1 = arith.constant 0 : i32
    return %c0_i32, %c0_i32_0 : i32, i32
  }
  func.func @transform_4(%arg0: i32) -> (i32, i32, i32) {
    %c0_i32 = arith.constant 0 : i32
    %c0_i32_0 = arith.constant 0 : i32
    %c0_i32_1 = arith.constant 0 : i32
    return %arg0, %c0_i32, %c0_i32_0 : i32, i32, i32
  }
}

</mosaic_0001>

<llo_original>
// kernel: tpu_custom_call.1
$region0: #{tpu_custom_call.1}
  #allocation0 [shape = 'u32[]', space=smem, size = 0x4, offset = 0x4, fixed_abs, tag = 'smem constant byte address 0x4 - core index']
  #allocation1 [shape = 'u32[144,128]{1,0:T(1,128)}', space=vmem, size = 0x12000, scoped, tag = 'internal scratch']
  #allocation2 [shape = 'bf16[144,256]{1,0:T(16,128)(2,1)}', space=vmem, size = 0x12000, scoped, tag = 'scratch operand']
  %s0 = inlined_call_operand.hbm [shape: bf16[2,16,384], index: 0, kind: input, shape index: {}]
  %s1 = inlined_call_operand.vmem [shape: bf16[16,144], index: 1, kind: input, shape index: {}]
  %s2 = inlined_call_operand.vmem [shape: f32[16,8], index: 2, kind: input, shape index: {}]
  %s3 = inlined_call_operand.vmem [shape: s32[1,256], index: 3, kind: input, shape index: {}]
  %s4 = inlined_call_operand.hbm [shape: bf16[2,16,256], index: 4, kind: output, shape index: {}]
  %s5 = sld [smem:[#allocation0]]
  $region53: #{tpu_custom_call.1} parent=0
    _
  %s7 = ssub.s32 1, %s5
  %s8 = scalar_select 0, %s7, %s5
  $region1: #{tpu_custom_call.1} parent=0
    #allocation3 [shape = 'u8[24576]{0}', space=vmem, size = 0x6000, scoped, tag = 'input window, operand 0']
    #allocation4 [shape = 's32[2]{0}', space=sflag, size = 0x8, scoped, tag = 'scoped memory for tpu_custom_call.1']
    #allocation5 [shape = 's32[2]{0}', space=sflag, size = 0x8, scoped, tag = 'scoped memory for tpu_custom_call.1']
    #allocation6 [shape = 'u8[16384]{0}', space=vmem, size = 0x4000, scoped, tag = 'output window, operand 0']
    %9 = vsyncpa [#allocation4], 0
    %s10 = scalar_lea.sflag [#allocation4], 1
    %11 = vsyncpa %s10, 0
    %12 = vsyncpa [#allocation5], 0
    %s13 = scalar_lea.sflag [#allocation5], 1
    %14 = vsyncpa %s13, 0
    loop: start=0, step=1, limit=4
    $region2: #{tpu_custom_call.1} parent=1 // loop_pre_header
      _
    $region3: #{tpu_custom_call.1} parent=1 // loop_header
      %s16 = sphi 0, %s20
      %p17 = scmp.ge.s32.totalorder %s16, 4
      %s26 = sphi 0, %s28
      %s29 = sphi 0, %s26
      %s30 = sphi 0, %s29
      %s46 = sphi 0, %s30
      %s50 = sphi 0, %s50
      %s52 = sphi 0, %s50
      %s53 = sphi 0, %s52
      %s67 = sphi 0, %s53
      %s71 = sphi 0, %s71
      %s73 = sphi 0, %s71
      %s74 = sphi 0, %s73
      %s88 = sphi 0, %s74
      %s92 = sphi 0, %s92
      %s94 = sphi 0, %s92
      %s95 = sphi 0, %s94
      %s109 = sphi 0, %s95
      %s115 = sphi 0, %s117
      %s118 = sphi 0, %s115
      %s119 = sphi 0, %s118
      %s135 = sphi 0, %s119
    $region4: #{tpu_custom_call.1} parent=1 // loop_header_branch
      %19 = sbr.rel (%p17) target = $region8
    $region5: #{tpu_custom_call.1} parent=1 // loop_body
      %s21 = ssub.s32 %s16, 1
      %s22 = ssub.s32 %s16, 2
      %s23 = sadd.s32 %s16, 1
      %s24 = ssub.s32 %s16, %s23
      %p25 = scmp.eq.s32.totalorder %s24, 0
      %s27 = sadd.s32 %s26, 1
      %s28 = scalar_select %p25, %s26, %s27
      %p31 = pneg %p25
      %p32 = scmp.eq.s32.totalorder %s16, 1
      %p33 = por %p31, %p32
      %p34 = scmp.ne.s32.totalorder %s26, %s29
      %p35 = scmp.eq.s32.totalorder %s16, 0
      %p36 = por %p34, %p35
      %p37 = scmp.ne.s32.totalorder %s26, %s29
      %p38 = scmp.eq.s32.totalorder %s21, 1
      %p39 = por %p37, %p38
      %p40 = scmp.ne.s32.totalorder %s29, %s30
      %p41 = scmp.eq.s32.totalorder %s21, 0
      %p42 = por %p40, %p41
      %p43 = scmp.ne.s32.totalorder %s29, %s30
      %p44 = scmp.eq.s32.totalorder %s22, 1
      %p45 = por %p43, %p44
      %p47 = scmp.ne.s32.totalorder %s30, %s46
      %p48 = scmp.eq.s32.totalorder %s22, 0
      %p49 = por %p47, %p48
      %s51 = sadd.s32 %s50, 1
      %p54 = scmp.eq.s32.totalorder %s16, 1
      %p55 = scmp.ne.s32.totalorder %s50, %s52
      %p56 = scmp.eq.s32.totalorder %s16, 0
      %p57 = por %p55, %p56
      %p58 = scmp.ne.s32.totalorder %s50, %s52
      %p59 = scmp.eq.s32.totalorder %s21, 1
      %p60 = por %p58, %p59
      %p61 = scmp.ne.s32.totalorder %s52, %s53
      %p62 = scmp.eq.s32.totalorder %s21, 0
      %p63 = por %p61, %p62
      %p64 = scmp.ne.s32.totalorder %s52, %s53
      %p65 = scmp.eq.s32.totalorder %s22, 1
      %p66 = por %p64, %p65
      %p68 = scmp.ne.s32.totalorder %s53, %s67
      %p69 = scmp.eq.s32.totalorder %s22, 0
      %p70 = por %p68, %p69
      %s72 = sadd.s32 %s71, 1
      %p75 = scmp.eq.s32.totalorder %s16, 1
      %p76 = scmp.ne.s32.totalorder %s71, %s73
      %p77 = scmp.eq.s32.totalorder %s16, 0
      %p78 = por %p76, %p77
      %p79 = scmp.ne.s32.totalorder %s71, %s73
      %p80 = scmp.eq.s32.totalorder %s21, 1
      %p81 = por %p79, %p80
      %p82 = scmp.ne.s32.totalorder %s73, %s74
      %p83 = scmp.eq.s32.totalorder %s21, 0
      %p84 = por %p82, %p83
      %p85 = scmp.ne.s32.totalorder %s73, %s74
      %p86 = scmp.eq.s32.totalorder %s22, 1
      %p87 = por %p85, %p86
      %p89 = scmp.ne.s32.totalorder %s74, %s88
      %p90 = scmp.eq.s32.totalorder %s22, 0
      %p91 = por %p89, %p90
      %s93 = sadd.s32 %s92, 1
      %p96 = scmp.eq.s32.totalorder %s16, 1
      %p97 = scmp.ne.s32.totalorder %s92, %s94
      %p98 = scmp.eq.s32.totalorder %s16, 0
      %p99 = por %p97, %p98
      %p100 = scmp.ne.s32.totalorder %s92, %s94
      %p101 = scmp.eq.s32.totalorder %s21, 1
      %p102 = por %p100, %p101
      %p103 = scmp.ne.s32.totalorder %s94, %s95
      %p104 = scmp.eq.s32.totalorder %s21, 0
      %p105 = por %p103, %p104
      %p106 = scmp.ne.s32.totalorder %s94, %s95
      %p107 = scmp.eq.s32.totalorder %s22, 1
      %p108 = por %p106, %p107
      %p110 = scmp.ne.s32.totalorder %s95, %s109
      %p111 = scmp.eq.s32.totalorder %s22, 0
      %p112 = por %p110, %p111
      %s113 = ssub.s32 %s16, %s23
      %p114 = scmp.eq.s32.totalorder %s113, 0
      %s116 = sadd.s32 %s115, 1
      %s117 = scalar_select %p114, %s115, %s116
      %p120 = pneg %p114
      %p121 = scmp.eq.s32.totalorder %s16, 1
      %p122 = por %p120, %p121
      %p123 = scmp.ne.s32.totalorder %s115, %s118
      %p124 = scmp.eq.s32.totalorder %s16, 0
      %p125 = por %p123, %p124
      %p126 = scmp.ne.s32.totalorder %s115, %s118
      %p127 = scmp.eq.s32.totalorder %s21, 1
      %p128 = por %p126, %p127
      %p129 = scmp.ne.s32.totalorder %s118, %s119
      %p130 = scmp.eq.s32.totalorder %s21, 0
      %p131 = por %p129, %p130
      %p132 = scmp.ne.s32.totalorder %s118, %s119
      %p133 = scmp.eq.s32.totalorder %s22, 1
      %p134 = por %p132, %p133
      %p136 = scmp.ne.s32.totalorder %s119, %s135
      %p137 = scmp.eq.s32.totalorder %s22, 0
      %p138 = por %p136, %p137
      %p139 = scmp.le.s32.totalorder 1, %s16
      %p140 = scmp.lt.s32.totalorder %s16, 3
      %p141 = pnand %p139, %p140
      %p142 = pneg %p141
      // Predicated region
      $region9: #{tpu_custom_call.1} parent=5 // pred_check
        _
      $region10: #{tpu_custom_call.1} parent=5 // pred_check_branch
        %144 = sbr.rel (%p141) target = $region12
      $region11: #{tpu_custom_call.1} parent=5 // pred_region
        %s145 = ssub.s32 %s16, 1
        // Predicated region
        $region13: #{tpu_custom_call.1} parent=11 // pred_check
          %p146 = pneg %p63
        $region14: #{tpu_custom_call.1} parent=11 // pred_check_branch
          %148 = sbr.rel (%p146) target = $region16
        $region15: #{tpu_custom_call.1} parent=11 // pred_region
          _
        $region16: #{tpu_custom_call.1} parent=11 // pred_fallthru
          _
        // Predicated region
        $region17: #{tpu_custom_call.1} parent=11 // pred_check
          %p149 = pneg %p84
        $region18: #{tpu_custom_call.1} parent=11 // pred_check_branch
          %151 = sbr.rel (%p149) target = $region20
        $region19: #{tpu_custom_call.1} parent=11 // pred_region
          _
        $region20: #{tpu_custom_call.1} parent=11 // pred_fallthru
          _
        // Predicated region
        $region21: #{tpu_custom_call.1} parent=11 // pred_check
          %p152 = pneg %p105
        $region22: #{tpu_custom_call.1} parent=11 // pred_check_branch
          %154 = sbr.rel (%p152) target = $region24
        $region23: #{tpu_custom_call.1} parent=11 // pred_region
          _
        $region24: #{tpu_custom_call.1} parent=11 // pred_fallthru
          _
      $region12: #{tpu_custom_call.1} parent=5 // pred_fallthru
        _
      %p155 = scmp.lt.s32.totalorder %s16, 2
      // Predicated region
      $region25: #{tpu_custom_call.1} parent=5 // pred_check
        %p156 = pneg %p155
      $region26: #{tpu_custom_call.1} parent=5 // pred_check_branch
        %158 = sbr.rel (%p156) target = $region28
      $region27: #{tpu_custom_call.1} parent=5 // pred_region
        // Predicated region
        $region29: #{tpu_custom_call.1} parent=27 // pred_check
          %p159 = pneg %p36
        $region30: #{tpu_custom_call.1} parent=27 // pred_check_branch
          %161 = sbr.rel (%p159) target = $region32
        $region31: #{tpu_custom_call.1} parent=27 // pred_region
          %s162 = sand.u32 %s26, 1
          %s163 = scalar_lea.sflag [#allocation4], %s162
          %s164 = sand.u32 %s26, 1
          %s165 = smul.addr %s164, 24
          %s166 = scalar_lea.vmem [#allocation3], %s165
          %s168 = ssub.s32 384, 384
          %169 = vsyncadd %s163, %s168
          %s170 = smul.addr %s16, 6
          %s171 = smul.addr %s170, 64
          %s172 = scalar_lea.hbm %s0, %s171
          %s173 = sshll.u32 %s166, 4
          %s174 = int_to_ptr.vmem [resolvable:$true] %s173
          %179 = dma.hbm_to_vmem [thread:$0]  %s172, 384, %s174, %s163, 192, 192, 12
        $region32: #{tpu_custom_call.1} parent=27 // pred_fallthru
          _
      $region28: #{tpu_custom_call.1} parent=5 // pred_fallthru
        _
      %p180 = scmp.le.s32.totalorder 1, %s16
      %p181 = scmp.lt.s32.totalorder %s16, 3
      %p182 = pnand %p180, %p181
      %p183 = pneg %p182
      // Predicated region
      $region33: #{tpu_custom_call.1} parent=5 // pred_check
        _
      $region34: #{tpu_custom_call.1} parent=5 // pred_check_branch
        %185 = sbr.rel (%p182) target = $region36
      $region35: #{tpu_custom_call.1} parent=5 // pred_region
        %s186 = ssub.s32 %s16, 1
        %s187 = sand.u32 %s29, 1
        %s188 = scalar_lea.sflag [#allocation4], %s187
        %s189 = sand.u32 %s29, 1
        %s190 = smul.addr %s189, 24
        %s191 = scalar_lea.vmem [#allocation3], %s190
        // Predicated region
        $region37: #{tpu_custom_call.1} parent=35 // pred_check
          %p192 = pneg %p42
        $region38: #{tpu_custom_call.1} parent=35 // pred_check_branch
          %194 = sbr.rel (%p192) target = $region40
        $region39: #{tpu_custom_call.1} parent=35 // pred_region
          %195 = dma.done %s188, 384
        $region40: #{tpu_custom_call.1} parent=35 // pred_fallthru
          _
        %s196 = sand.u32 %s29, 1
        %s197 = scalar_lea.sflag [#allocation4], %s196
        %s198 = sand.u32 %s29, 1
        %s199 = smul.addr %s198, 24
        %s200 = scalar_lea.vmem [#allocation3], %s199
        %p201 = pneg %p42
        %p202 = pneg %p39
        %p203 = pneg %p63
        %p204 = pneg %p60
        %p205 = pneg %p84
        %p206 = pneg %p81
        %p207 = pneg %p105
        %p208 = pneg %p102
        %p209 = pneg %p131
        %p210 = pneg %p128
        %s211 = sand.u32 %s118, 1
        %s212 = scalar_lea.sflag [#allocation5], %s211
        %s213 = sand.u32 %s118, 1
        %s214 = smul.addr %s213, 16
        %s215 = scalar_lea.vmem [#allocation6], %s214
        %v219 = vld [vmem:[%s3] sm:$0x3]
        %v220 = vlaneseq
        %v221 = vshrl.u32 %v220, 7
        %v222 = vsub.s32 0, %v221
        %v223 = vrot.slane %v219, %v222
        %v224 = vlaneseq
        %v225 = vshrl.u32 %v224, 7
        %v226 = vsub.s32 1, %v225
        %v227 = vrot.slane %v219, %v226
        %vm228 = vcmp.ne.s32.totalorder %v223, 0
        %vm229 = vcmp.ne.s32.totalorder %v227, 0
        %vm230 = vcmp.ne.s32.totalorder %v223, 15
        %vm231 = vcmp.ne.s32.totalorder %v227, 15
        %v232 = vld [vmem:[%s191] sm:$0xff]
        %v233 = vld [vmem:[%s191 + $0x8] sm:$0xf]
        %v234 = vld [vmem:[%s191 + $0xc] sm:$0xff]
        %v235 = vld [vmem:[%s191 + $0x14] sm:$0xf]
        %vm236 = vmpackc.low %vm229, %vm228
        %v237 = vsel %vm236, 65537, 0
        %238 = vrot.lane.b32.xlu0 %v237, 15
        %v239 = vpop.permute.xlu0 %238
        %v240 = vrot.slane %v239, 4
        %vm241 = vcmask 121856
        %v242 = vsel %vm241, %v240, %v239
        %vm243 = vcmp.ne.s16.totalorder %v242, 0
        %vm244 = vcmp.ne.s16.totalorder %v240, 0
        %v245 = vsel %vm243, %v232, 0
        %v246 = vsel %vm244, %v233, 0
        %v247 = vsel %vm243, %v234, 0
        %v248 = vsel %vm244, %v235, 0
        %v253 = vunpack.c.l.b16 %v245
        %v254 = vunpack.c.h.b16 %v245
        %v255 = vunpack.c.l.b16 %v246
        %v256 = vunpack.c.l.b16 %v247
        %v257 = vunpack.c.h.b16 %v247
        %v258 = vunpack.c.l.b16 %v248
        %v259 = vpack.c.b16 %v256, %v253
        %v260 = vpack.c.b16 %v257, %v254
        %v261 = vpack.c.b16 %v258, %v255
        %262 = vrot.lane.b32.xlu0 %v259, 113
        %v263 = vpop.permute.xlu0 %262
        %264 = vrot.lane.b32.xlu0 %v260, 113
        %v265 = vpop.permute.xlu0 %264
        %266 = vrot.lane.b32.xlu0 %v261, 113
        %v267 = vpop.permute.xlu0 %266
        %vm268 = vcmask 924672
        %v269 = vsel %vm268, %v263, %v265
        %v270 = vsel %vm268, %v265, %v267
        %273 = vst [vmem:[#allocation2] sm:$0xff] %v269
        %274 = vst [vmem:[#allocation2 + $0x8] sm:$0xff] %v270
        %v279 = vunpack.c.l.b16 %v232
        %v280 = vunpack.c.h.b16 %v232
        %v281 = vunpack.c.l.b16 %v233
        %v282 = vunpack.c.l.b16 %v234
        %v283 = vunpack.c.h.b16 %v234
        %v284 = vunpack.c.l.b16 %v235
        %v285 = vpack.c.b16 %v282, %v279
        %v286 = vpack.c.b16 %v283, %v280
        %v287 = vpack.c.b16 %v284, %v281
        %288 = vrot.lane.b32.xlu0 %v285, 112
        %v289 = vpop.permute.xlu0 %288
        %290 = vrot.lane.b32.xlu0 %v286, 112
        %v291 = vpop.permute.xlu0 %290
        %292 = vrot.lane.b32.xlu0 %v287, 112
        %v293 = vpop.permute.xlu0 %292
        %vm294 = vcmask 916480
        %v295 = vsel %vm294, %v289, %v291
        %v296 = vsel %vm294, %v291, %v293
        %299 = vst [vmem:[#allocation2 + $0x10] sm:$0xff] %v295
        %300 = vst [vmem:[#allocation2 + $0x18] sm:$0xff] %v296
        %vm301 = vmpackc.low %vm231, %vm230
        %v302 = vsel %vm301, 65537, 0
        %303 = vrot.lane.b32.xlu0 %v302, 17
        %v304 = vpop.permute.xlu0 %303
        %v305 = vrot.slane %v304, 4
        %vm306 = vcmask 138240
        %v307 = vsel %vm306, %v305, %v304
        %vm308 = vcmp.ne.s16.totalorder %v307, 0
        %vm309 = vcmp.ne.s16.totalorder %v305, 0
        %v310 = vsel %vm308, %v232, 0
        %v311 = vsel %vm309, %v233, 0
        %v312 = vsel %vm308, %v234, 0
        %v313 = vsel %vm309, %v235, 0
        %v318 = vunpack.c.l.b16 %v310
        %v319 = vunpack.c.h.b16 %v310
        %v320 = vunpack.c.l.b16 %v311
        %v321 = vunpack.c.l.b16 %v312
        %v322 = vunpack.c.h.b16 %v312
        %v323 = vunpack.c.l.b16 %v313
        %v324 = vpack.c.b16 %v321, %v318
        %v325 = vpack.c.b16 %v322, %v319
        %v326 = vpack.c.b16 %v323, %v320
        %327 = vrot.lane.b32.xlu0 %v324, 111
        %v328 = vpop.permute.xlu0 %327
        %329 = vrot.lane.b32.xlu0 %v325, 111
        %v330 = vpop.permute.xlu0 %329
        %331 = vrot.lane.b32.xlu0 %v326, 111
        %v332 = vpop.permute.xlu0 %331
        %vm333 = vcmask 908288
        %v334 = vsel %vm333, %v328, %v330
        %v335 = vsel %vm333, %v330, %v332
        %338 = vst [vmem:[#allocation2 + $0x20] sm:$0xff] %v334
        %339 = vst [vmem:[#allocation2 + $0x28] sm:$0xff] %v335
        %340 = vrot.lane.b32.xlu0 %v237, 31
        %v341 = vpop.permute.xlu0 %340
        %v342 = vrot.slane %v341, 4
        %vm343 = vcmask 252928
        %v344 = vsel %vm343, %v342, %v341
        %vm345 = vcmp.ne.s16.totalorder %v344, 0
        %vm346 = vcmp.ne.s16.totalorder %v342, 0
        %v347 = vsel %vm345, %v232, 0
        %v348 = vsel %vm346, %v233, 0
        %v349 = vsel %vm345, %v234, 0
        %v350 = vsel %vm346, %v235, 0
        %v355 = vunpack.c.l.b16 %v347
        %v356 = vunpack.c.h.b16 %v347
        %v357 = vunpack.c.l.b16 %v348
        %v358 = vunpack.c.l.b16 %v349
        %v359 = vunpack.c.h.b16 %v349
        %v360 = vunpack.c.l.b16 %v350
        %v361 = vpack.c.b16 %v358, %v355
        %v362 = vpack.c.b16 %v359, %v356
        %v363 = vpack.c.b16 %v360, %v357
        %364 = vrot.lane.b32.xlu0 %v361, 97
        %v365 = vpop.permute.xlu0 %364
        %366 = vrot.lane.b32.xlu0 %v362, 97
        %v367 = vpop.permute.xlu0 %366
        %368 = vrot.lane.b32.xlu0 %v363, 97
        %v369 = vpop.permute.xlu0 %368
        %vm370 = vcmask 793600
        %v371 = vsel %vm370, %v365, %v367
        %v372 = vsel %vm370, %v367, %v369
        %375 = vst [vmem:[#allocation2 + $0x30] sm:$0xff] %v371
        %376 = vst [vmem:[#allocation2 + $0x38] sm:$0xff] %v372
        %377 = vrot.lane.b32.xlu0 %v285, 96
        %v378 = vpop.permute.xlu0 %377
        %379 = vrot.lane.b32.xlu0 %v286, 96
        %v380 = vpop.permute.xlu0 %379
        %381 = vrot.lane.b32.xlu0 %v287, 96
        %v382 = vpop.permute.xlu0 %381
        %vm383 = vcmask 785408
        %v384 = vsel %vm383, %v378, %v380
        %v385 = vsel %vm383, %v380, %v382
        %388 = vst [vmem:[#allocation2 + $0x40] sm:$0xff] %v384
        %389 = vst [vmem:[#allocation2 + $0x48] sm:$0xff] %v385
        %390 = vrot.lane.b32.xlu0 %v302, 33
        %v391 = vpop.permute.xlu0 %390
        %v392 = vrot.slane %v391, 4
        %vm393 = vcmask 269312
        %v394 = vsel %vm393, %v392, %v391
        %vm395 = vcmp.ne.s16.totalorder %v394, 0
        %vm396 = vcmp.ne.s16.totalorder %v392, 0
        %v397 = vsel %vm395, %v232, 0
        %v398 = vsel %vm396, %v233, 0
        %v399 = vsel %vm395, %v234, 0
        %v400 = vsel %vm396, %v235, 0
        %v405 = vunpack.c.l.b16 %v397
        %v406 = vunpack.c.h.b16 %v397
        %v407 = vunpack.c.l.b16 %v398
        %v408 = vunpack.c.l.b16 %v399
        %v409 = vunpack.c.h.b16 %v399
        %v410 = vunpack.c.l.b16 %v400
        %v411 = vpack.c.b16 %v408, %v405
        %v412 = vpack.c.b16 %v409, %v406
        %v413 = vpack.c.b16 %v410, %v407
        %414 = vrot.lane.b32.xlu0 %v411, 95
        %v415 = vpop.permute.xlu0 %414
        %416 = vrot.lane.b32.xlu0 %v412, 95
        %v417 = vpop.permute.xlu0 %416
        %418 = vrot.lane.b32.xlu0 %v413, 95
        %v419 = vpop.permute.xlu0 %418
        %vm420 = vcmask 777216
        %v421 = vsel %vm420, %v415, %v417
        %v422 = vsel %vm420, %v417, %v419
        %425 = vst [vmem:[#allocation2 + $0x50] sm:$0xff] %v421
        %426 = vst [vmem:[#allocation2 + $0x58] sm:$0xff] %v422
        %427 = vrot.lane.b32.xlu0 %v237, 47
        %v428 = vpop.permute.xlu0 %427
        %v429 = vrot.slane %v428, 4
        %vm430 = vcmask 384000
        %v431 = vsel %vm430, %v429, %v428
        %vm432 = vcmp.ne.s16.totalorder %v431, 0
        %vm433 = vcmp.ne.s16.totalorder %v429, 0
        %v434 = vsel %vm432, %v232, 0
        %v435 = vsel %vm433, %v233, 0
        %v436 = vsel %vm432, %v234, 0
        %v437 = vsel %vm433, %v235, 0
        %v442 = vunpack.c.l.b16 %v434
        %v443 = vunpack.c.h.b16 %v434
        %v444 = vunpack.c.l.b16 %v435
        %v445 = vunpack.c.l.b16 %v436
        %v446 = vunpack.c.h.b16 %v436
        %v447 = vunpack.c.l.b16 %v437
        %v448 = vpack.c.b16 %v445, %v442
        %v449 = vpack.c.b16 %v446, %v443
        %v450 = vpack.c.b16 %v447, %v444
        %451 = vrot.lane.b32.xlu0 %v448, 81
        %v452 = vpop.permute.xlu0 %451
        %453 = vrot.lane.b32.xlu0 %v449, 81
        %v454 = vpop.permute.xlu0 %453
        %455 = vrot.lane.b32.xlu0 %v450, 81
        %v456 = vpop.permute.xlu0 %455
        %vm457 = vcmask 662528
        %v458 = vsel %vm457, %v452, %v454
        %v459 = vsel %vm457, %v454, %v456
        %462 = vst [vmem:[#allocation2 + $0x60] sm:$0xff] %v458
        %463 = vst [vmem:[#allocation2 + $0x68] sm:$0xff] %v459
        %464 = vrot.lane.b32.xlu0 %v285, 80
        %v465 = vpop.permute.xlu0 %464
        %466 = vrot.lane.b32.xlu0 %v286, 80
        %v467 = vpop.permute.xlu0 %466
        %468 = vrot.lane.b32.xlu0 %v287, 80
        %v469 = vpop.permute.xlu0 %468
        %vm470 = vcmask 654336
        %v471 = vsel %vm470, %v465, %v467
        %v472 = vsel %vm470, %v467, %v469
        %475 = vst [vmem:[#allocation2 + $0x70] sm:$0xff] %v471
        %476 = vst [vmem:[#allocation2 + $0x78] sm:$0xff] %v472
        %477 = vrot.lane.b32.xlu0 %v302, 49
        %v478 = vpop.permute.xlu0 %477
        %v479 = vrot.slane %v478, 4
        %vm480 = vcmask 400384
        %v481 = vsel %vm480, %v479, %v478
        %vm482 = vcmp.ne.s16.totalorder %v481, 0
        %vm483 = vcmp.ne.s16.totalorder %v479, 0
        %v484 = vsel %vm482, %v232, 0
        %v485 = vsel %vm483, %v233, 0
        %v486 = vsel %vm482, %v234, 0
        %v487 = vsel %vm483, %v235, 0
        %v492 = vunpack.c.l.b16 %v484
        %v493 = vunpack.c.h.b16 %v484
        %v494 = vunpack.c.l.b16 %v485
        %v495 = vunpack.c.l.b16 %v486
        %v496 = vunpack.c.h.b16 %v486
        %v497 = vunpack.c.l.b16 %v487
        %v498 = vpack.c.b16 %v495, %v492
        %v499 = vpack.c.b16 %v496, %v493
        %v500 = vpack.c.b16 %v497, %v494
        %501 = vrot.lane.b32.xlu0 %v498, 79
        %v502 = vpop.permute.xlu0 %501
        %503 = vrot.lane.b32.xlu0 %v499, 79
        %v504 = vpop.permute.xlu0 %503
        %505 = vrot.lane.b32.xlu0 %v500, 79
        %v506 = vpop.permute.xlu0 %505
        %vm507 = vcmask 646144
        %v508 = vsel %vm507, %v502, %v504
        %v509 = vsel %vm507, %v504, %v506
        %512 = vst [vmem:[#allocation2 + $0x80] sm:$0xff] %v508
        %513 = vst [vmem:[#allocation2 + $0x88] sm:$0xff] %v509
        %v514 = vld [vmem:[%s1] sm:$0xff]
        %v515 = vld [vmem:[%s1 + $0x8] sm:$0xff]
        %v516 = vld [vmem:[#allocation2] sm:$0xff]
        %v517 = vld [vmem:[#allocation2 + $0x8] sm:$0xff]
        %v518 = vld [vmem:[#allocation2 + $0x10] sm:$0xff]
        %v519 = vld [vmem:[#allocation2 + $0x18] sm:$0xff]
        %v520 = vld [vmem:[#allocation2 + $0x20] sm:$0xff]
        %v521 = vld [vmem:[#allocation2 + $0x28] sm:$0xff]
        %v522 = vld [vmem:[#allocation2 + $0x30] sm:$0xff]
        %v523 = vld [vmem:[#allocation2 + $0x38] sm:$0xff]
        %v524 = vld [vmem:[#allocation2 + $0x40] sm:$0xff]
        %v525 = vld [vmem:[#allocation2 + $0x48] sm:$0xff]
        %v526 = vld [vmem:[#allocation2 + $0x50] sm:$0xff]
        %v527 = vld [vmem:[#allocation2 + $0x58] sm:$0xff]
        %v528 = vld [vmem:[#allocation2 + $0x60] sm:$0xff]
        %v529 = vld [vmem:[#allocation2 + $0x68] sm:$0xff]
        %v530 = vld [vmem:[#allocation2 + $0x70] sm:$0xff]
        %v531 = vld [vmem:[#allocation2 + $0x78] sm:$0xff]
        %v532 = vld [vmem:[#allocation2 + $0x80] sm:$0xff]
        %v533 = vld [vmem:[#allocation2 + $0x88] sm:$0xff]
        %v534 = vld [vmem:[%s2] sm:$0xff]
        %v535 = vld [vmem:[%s2 + $0x8] sm:$0xff]
        %v536 = vld [vmem:[%s2] sm:$0x1]
        %538 = vset.pattern.permute.xlu0 0
        %539 = vperm.xlu0 %538, %v534
        %v540 = vpop.permute.xlu0 %539
        %543 = vset.pattern.permute.xlu0 0
        %544 = vperm.xlu0 %543, %v535
        %v545 = vpop.permute.xlu0 %544
        %v549 = vunpack.c.l.b16 %v514
        %v550 = vunpack.c.h.b16 %v514
        %v551 = vunpack.c.l.b16 %v515
        %v552 = vunpack.c.h.b16 %v515
        %v553 = vpack.c.b16 %v551, %v549
        %v554 = vpack.c.b16 %v552, %v550
        %vm556 = vcmask 130048
        %v558 = vsel %vm556, %v554, 0
        %560 = vmatprep.subr.bf16.mxu0 %v517
        %561 = vmatpush1.bf16.msra.mxu0 %v516
        %562 = vmatprep.subr.bf16.mxu0 %v519
        %563 = vmatpush1.bf16.msra.mxu0 %v518
        %564 = vmatprep.subr.bf16.mxu0 %v521
        %565 = vmatpush1.bf16.msra.mxu0 %v520
        %566 = vmatprep.subr.bf16.mxu0 %v523
        %567 = vmatpush1.bf16.msra.mxu0 %v522
        %568 = vmatprep.subr.bf16.mxu0 %v525
        %569 = vmatpush1.bf16.msra.mxu0 %v524
        %570 = vmatprep.subr.bf16.mxu0 %v527
        %571 = vmatpush1.bf16.msra.mxu0 %v526
        %572 = vmatprep.subr.bf16.mxu0 %v529
        %573 = vmatpush1.bf16.msra.mxu0 %v528
        %574 = vmatprep.subr.bf16.mxu0 %v531
        %575 = vmatpush1.bf16.msra.mxu0 %v530
        %576 = vmatprep.subr.bf16.mxu0 %v533
        %577 = vmatpush1.bf16.msra.mxu0 %v532
        %578 = vmatprep.subr.bf16.mxu0 0
        %579 = vmatpush1.bf16.msra.mxu0 0
        %580 = vmatprep.subr.bf16.mxu0 0
        %581 = vmatpush1.bf16.msra.mxu0 0
        %582 = vmatprep.subr.bf16.mxu0 0
        %583 = vmatpush1.bf16.msra.mxu0 0
        %584 = vmatprep.subr.bf16.mxu0 0
        %585 = vmatpush1.bf16.msra.mxu0 0
        %586 = vmatprep.subr.bf16.mxu0 0
        %587 = vmatpush1.bf16.msra.mxu0 0
        %588 = vmatprep.subr.bf16.mxu0 0
        %589 = vmatpush1.bf16.msra.mxu0 0
        %590 = vmatprep.subr.bf16.mxu0 0
        %591 = vmatpush1.bf16.msra.mxu0 0
        %592 = vmatprep.mubr.bf16.mxu0 %v558
        %593 = vmatmul.mubr.bf16.gmra.mrb[0].mxu0 %v553
        %v594 = vpop.f32.mrb[0].mxu0
        %v595 = vadd.f32 %v540, %v594
        %v596 = vpop.f32.mrb[0].mxu0
        %v597 = vadd.f32 %v540, %v596
        %v598 = vpop.f32.mrb[0].mxu0
        %v599 = vadd.f32 %v545, %v598
        %v600 = vpop.f32.mrb[0].mxu0
        %v601 = vadd.f32 %v545, %v600
        %602 = vdwg.mxu0
        %v603 = vadd.f32 %v595, %v597
        %604 = vadd.xlane.f32.xlu0 %v603
        %v605 = vpop.xlane.xlu0 %604
        %v606 = vadd.f32 %v599, %v601
        %607 = vadd.xlane.f32.xlu0 %v606
        %v608 = vpop.xlane.xlu0 %607
        %v609 = vrcp.pop 256.0
        %v610 = vmul.f32 %v605, %v609
        %v611 = vmul.f32 %v608, %v609
        %v612 = vmul.f32 %v534, %v610
        %v613 = vmul.f32 %v535, %v611
        %vm614 = vcmask 23560
        %v615 = vsel %vm614, %v612, 0.0
        %v616 = vsel %vm614, %v613, 0.0
        %v617 = vadd.f32 %v615, %v616
        %v618 = vrot.slane %v617, 4
        %v619 = vadd.f32 %v617, %v618
        %v620 = vrot.slane %v619, 2
        %v621 = vadd.f32 %v619, %v620
        %v622 = vrot.slane %v621, 1
        %v623 = vadd.f32 %v621, %v622
        %625 = vrot.lane.b32.xlu0 %v536, 123
        %v626 = vpop.permute.xlu0 %625
        %v628 = vadd.f32 %v623, %v626
        %v629 = vmax.f32 %v628, 0.0
        %v630 = vlaneseq
        %v631 = vshrl.u32 %v630, 7
        %v632 = vsub.s32 0, %v631
        %v633 = vrot.slane %v629, %v632
        %635 = vrot.lane.b32.xlu0 %v633, 2
        %v636 = vpop.permute.xlu0 %635
        %v638 = vmul.f32 %v534, %v636
        %v639 = vmul.f32 %v535, %v636
        %642 = vrot.lane.b32.xlu0 %v638, 125
        %v643 = vpop.permute.xlu0 %642
        %644 = vrot.lane.b32.xlu0 %v639, 125
        %v645 = vpop.permute.xlu0 %644
        %vm648 = vcmask 15360
        %v649 = vsel %vm648, %v643, 0.0
        %650 = vadd.xlane.f32.xlu0 %v649
        %v651 = vpop.xlane.xlu0 %650
        %v652 = vsel %vm648, %v645, 0.0
        %653 = vadd.xlane.f32.xlu0 %v652
        %v654 = vpop.xlane.xlu0 %653
        %v655 = vadd.f32 %v651, %v534
        %v656 = vadd.f32 %v654, %v535
        %v657 = vxor.u32 %v655, 2147483648
        %v658 = vxor.u32 %v656, 2147483648
        %v659 = vmul.f32 %v657, 1.442695
        %v660 = vpow.pop %v659
        %v661 = vmul.f32 %v658, 1.442695
        %v662 = vpow.pop %v661
        %v663 = vadd.f32 %v660, 1.0
        %v664 = vadd.f32 %v662, 1.0
        %v665 = vrcp.pop %v663
        %v666 = vmul.f32 1.0, %v665
        %v667 = vrcp.pop %v664
        %v668 = vmul.f32 1.0, %v667
        %670 = vset.pattern.permute.xlu0 5
        %671 = vperm.xlu0 %670, %v666
        %v672 = vpop.permute.xlu0 %671
        %675 = vset.pattern.permute.xlu0 5
        %676 = vperm.xlu0 %675, %v668
        %v677 = vpop.permute.xlu0 %676
        %v679 = vmul.f32 %v595, %v672
        %v680 = vmul.f32 %v597, %v672
        %v681 = vmul.f32 %v599, %v677
        %v682 = vmul.f32 %v601, %v677
        %v683 = vmax.f32 %v679, 0.0
        %v684 = vmax.f32 %v680, 0.0
        %v685 = vmax.f32 %v681, 0.0
        %v686 = vmax.f32 %v682, 0.0
        %v687 = vpack.c.bf16 %v685, %v683
        %v688 = vpack.c.bf16 %v686, %v684
        %v691 = vunpack.c.l.b16 %v687
        %v692 = vunpack.c.l.b16 %v688
        %v693 = vunpack.c.h.b16 %v687
        %v694 = vunpack.c.h.b16 %v688
        %v695 = vpack.c.b16 %v692, %v691
        %v696 = vpack.c.b16 %v694, %v693
        %699 = vst [vmem:[%s215] sm:$0xff] %v695
        %700 = vst [vmem:[%s215 + $0x8] sm:$0xff] %v696
        %s701 = sand.u32 %s118, 1
        %s702 = scalar_lea.sflag [#allocation5], %s701
        %s703 = sand.u32 %s118, 1
        %s704 = smul.addr %s703, 16
        %s705 = scalar_lea.vmem [#allocation6], %s704
        // Predicated region
        $region41: #{tpu_custom_call.1} parent=35 // pred_check
          %p706 = pneg %p128
        $region42: #{tpu_custom_call.1} parent=35 // pred_check_branch
          %708 = sbr.rel (%p706) target = $region44
        $region43: #{tpu_custom_call.1} parent=35 // pred_region
          %s710 = ssub.s32 256, 256
          %711 = vsyncadd %s702, %s710
          %s712 = smul.addr %s21, 4
          %s713 = smul.addr %s712, 64
          %s714 = scalar_lea.hbm %s4, %s713
          %s715 = sshll.u32 %s705, 4
          %s716 = int_to_ptr.vmem [resolvable:$true] %s715
          %721 = dma.vmem_to_hbm [thread:$0]  %s716, 256, %s714, %s702, 128, 128, 8
        $region44: #{tpu_custom_call.1} parent=35 // pred_fallthru
          _
      $region36: #{tpu_custom_call.1} parent=5 // pred_fallthru
        _
      %p722 = scmp.le.s32.totalorder 2, %s16
      // Predicated region
      $region45: #{tpu_custom_call.1} parent=5 // pred_check
        %p723 = pneg %p722
      $region46: #{tpu_custom_call.1} parent=5 // pred_check_branch
        %725 = sbr.rel (%p723) target = $region48
      $region47: #{tpu_custom_call.1} parent=5 // pred_region
        %s726 = ssub.s32 %s16, 2
        // Predicated region
        $region49: #{tpu_custom_call.1} parent=47 // pred_check
          %p727 = pneg %p134
        $region50: #{tpu_custom_call.1} parent=47 // pred_check_branch
          %729 = sbr.rel (%p727) target = $region52
        $region51: #{tpu_custom_call.1} parent=47 // pred_region
          %s730 = sand.u32 %s119, 1
          %s731 = scalar_lea.sflag [#allocation5], %s730
          %s732 = sand.u32 %s119, 1
          %s733 = smul.addr %s732, 16
          %s734 = scalar_lea.vmem [#allocation6], %s733
          %735 = dma.done %s731, 256
        $region52: #{tpu_custom_call.1} parent=47 // pred_fallthru
          _
      $region48: #{tpu_custom_call.1} parent=5 // pred_fallthru
        _
    $region6: #{tpu_custom_call.1} parent=1 // loop_footer
      %s20 = sadd.s32 1, %s16
    $region7: #{tpu_custom_call.1} parent=1 // loop_footer_branch
      %15 = sbr.rel target = $region3
    $region8: #{tpu_custom_call.1} parent=1 // loop_exit
      _
    %736 = vsyncpa [#allocation4], 1
    %s737 = scalar_lea.sflag [#allocation4], 1
    %738 = vsyncpa %s737, 1
    %739 = vsyncpa [#allocation5], 1
    %s740 = scalar_lea.sflag [#allocation5], 1
    %741 = vsyncpa %s740, 1

</llo_original>
